<compile_context>
chip_gen: v7x
topology: tpu7x:2x2x1
jax: 0.10.0
libtpu: 0.0.40
codegen_flags: <defaults>
</compile_context>

<pallas_src>
import math

import jax
import jax.numpy as jnp
from jax.experimental import pallas as pl
from jax.experimental.pallas import tpu as pltpu


def _scalable_tanh_kernel(scale_ref, x_ref, o_ref):
    # scale_ref: (1, tn) tile in the compute dtype (f32, or bf16 on v6e/v7x
    #            for bf16 inputs); resident across the inner grid axis.
    # x_ref / o_ref: (tm, tn) tiles in the input/output dtype.
    x = x_ref[...].astype(scale_ref.dtype)
    o_ref[...] = (scale_ref[...] * jnp.tanh(x)).astype(o_ref.dtype)


def _round_up(v, m):
    return ((v + m - 1) // m) * m


def _native_bf16_math_ok():
    """bf16 VPU/EUP exists on v6e/v7x; keep f32 compute on v5e and older."""
    try:
        kind = jax.devices()[0].device_kind.lower()
    except Exception:
        return False
    return any(tag in kind for tag in ("v6", "v7", "7x"))


def scalable_tanh(x, scale, *, tile_budget_bytes=4 << 20, donate_x=False):
    """out = scale * tanh(x); scale (C,) broadcasts over x's last dim."""
    orig_shape = x.shape
    out_dtype = x.dtype
    C = orig_shape[-1]
    assert scale.shape == (C,), "scale must match last dim of x"

    if x.size == 0:
        return jnp.zeros(orig_shape, out_dtype)

    # Compute dtype: bf16-native math only where the hardware has bf16 EUP/VPU.
    if out_dtype == jnp.bfloat16 and _native_bf16_math_ok():
        compute_dtype = jnp.bfloat16
    else:
        compute_dtype = jnp.float32

    M = x.size // C  # logical rows after flattening leading dims

    # ---- lane-dense packing: fold k consecutive rows into one slab row so the
    # last dim W = k*C is always a multiple of 128 lanes (k = 128/gcd(C,128)).
    k = 1
    if C % 128 != 0:
        k = 128 // math.gcd(C, 128)  # >= 2 and k*C % 128 == 0

    x2d = x.reshape(M, C)
    M_pad = _round_up(M, k)
    if M_pad != M:
        # <= k-1 <= 127 padded rows; tanh(0) = 0 so the pad is benign and the
        # padded rows are sliced off after the kernel.
        x2d = jnp.pad(x2d, ((0, M_pad - M), (0, 0)))
    W = k * C
    rows = M_pad // k
    x2d = x2d.reshape(rows, W)

    scale_c = scale.astype(compute_dtype).reshape(1, C)
    scale_row = jnp.tile(scale_c, (1, k)) if k > 1 else scale_c  # (1, W)

    itemsize = jnp.dtype(out_dtype).itemsize

    # ---- lane tile: only split very wide rows; tn is a multiple of 128 or W.
    tn_cap = max(128, ((tile_budget_bytes // (8 * itemsize)) // 128) * 128)
    tn = W if W <= tn_cap else tn_cap

    # ---- row tile: largest multiple of 8 keeping tm*tn*itemsize under budget.
    row_budget = max(1, tile_budget_bytes // max(1, tn * itemsize))
    if rows <= row_budget:
        tm = rows  # block == full dim (no multiple-of-8 requirement)
    else:
        tm = max(8, (row_budget // 8) * 8)

    # ---- v7x megacore: guarantee >= 2 steps on a parallel axis when possible.
    if tm == rows and tn == W and rows > 8:
        tm = max(8, _round_up(pl.cdiv(rows, 2), 8))

    # Grid ordered (j, i): scale's block index (0, j) is constant across the
    # inner i axis, so its tile stays resident (no per-step re-DMA).
    grid = (pl.cdiv(W, tn), pl.cdiv(rows, tm))

    # ---- scoped-VMEM sizing: x + out tiles are double-buffered, plus scale.
    tile_bytes = tm * tn * itemsize
    scale_bytes = tn * jnp.dtype(compute_dtype).itemsize
    vmem_needed = 2 * (2 * tile_bytes) + 2 * scale_bytes
    vmem_limit = int(min(64 << 20, max(24 << 20, vmem_needed + (8 << 20))))

    extra = {}
    if donate_x:
        # x is input index 1 (after scale_row); output 0 reuses its buffer.
        extra["input_output_aliases"] = {1: 0}

    out = pl.pallas_call(
        _scalable_tanh_kernel,
        out_shape=jax.ShapeDtypeStruct((rows, W), out_dtype),
        grid_spec=pltpu.PrefetchScalarGridSpec(
            num_scalar_prefetch=0,
            grid=grid,
            in_specs=[
                pl.BlockSpec((1, tn), lambda j, i: (0, j)),    # scale (resident)
                pl.BlockSpec((tm, tn), lambda j, i: (i, j)),   # x tile
            ],
            out_specs=pl.BlockSpec((tm, tn), lambda j, i: (i, j)),
        ),
        compiler_params=pltpu.CompilerParams(
            dimension_semantics=("parallel", "parallel"),
            vmem_limit_bytes=vmem_limit,
        ),
        **extra,
    )(scale_row, x2d)

    out = out.reshape(M_pad, C)
    if M_pad != M:
        out = out[:M]
    return out.reshape(orig_shape)


if __name__ == "__main__":
    key = jax.random.PRNGKey(0)
    kx, ks = jax.random.split(key)

    # Shapes consistent with the module: x = (batch, seq, hidden), scale = (hidden,)
    batch, seq, hidden = 2, 8, 32
    x = jax.random.normal(kx, (batch, seq, hidden), dtype=jnp.float32)

    # Module's __init__ uses zeros; use a deterministic nonzero scale here so
    # the numerical check is meaningful.
    scale = 0.1 * jax.random.normal(ks, (hidden,), dtype=jnp.float32)

    out = jax.block_until_ready(scalable_tanh(x, scale))
    ref = scale * jnp.tanh(x)
    assert out.shape == x.shape and out.dtype == x.dtype
    assert jnp.allclose(out, ref, atol=1e-6, rtol=1e-6)

    # bf16 input path: tanh may run natively in bf16 on v6e/v7x (documented
    # small deviation vs. the f32 reference; tolerance covers it).
    x_bf = x.astype(jnp.bfloat16)
    out_bf = jax.block_until_ready(scalable_tanh(x_bf, scale))
    ref_bf = (scale * jnp.tanh(x_bf.astype(jnp.float32))).astype(jnp.bfloat16)
    assert out_bf.dtype == jnp.bfloat16
    assert jnp.allclose(out_bf.astype(jnp.float32),
                        ref_bf.astype(jnp.float32), atol=2e-2, rtol=2e-2)

    # Row-padding path: M = 15 is not a multiple of k = 128/gcd(32,128) = 4.
    x_odd = jax.random.normal(kx, (3, 5, hidden), dtype=jnp.float32)
    out_odd = jax.block_until_ready(scalable_tanh(x_odd, scale))
    assert out_odd.shape == x_odd.shape
    assert jnp.allclose(out_odd, scale * jnp.tanh(x_odd), atol=1e-6, rtol=1e-6)

    # Optional aliasing path (caller may donate x's buffer).
    out_alias = jax.block_until_ready(scalable_tanh(x, scale, donate_x=True))
    assert jnp.allclose(out_alias, ref, atol=1e-6, rtol=1e-6)

    # Exact module init (scale = zeros) -> all-zero output.
    out_zero = jax.block_until_ready(
        scalable_tanh(x, jnp.zeros((hidden,), dtype=jnp.float32))
    )
    assert jnp.all(out_zero == 0.0)

    print("KERNEL_OK")
</pallas_src>

<mosaic_0001>
module attributes {stable_mosaic.version = 11 : i64} {
  func.func @_scalable_tanh_kernel(%arg0: i32, %arg1: i32, %arg2: memref<1x128xf32, #tpu.memory_space<vmem>>, %arg3: memref<4x128xf32, #tpu.memory_space<vmem>>, %arg4: memref<4x128xf32, #tpu.memory_space<vmem>>) attributes {dimension_semantics = [#tpu.dimension_semantics<parallel>, #tpu.dimension_semantics<parallel>], iteration_bounds = array<i64: 1, 1>, scalar_prefetch = 0 : i64, scratch_operands = 0 : i64, tpu.core_type = #tpu.core_type<tc>, window_params = [{transform_indices = @transform_0, window_bounds = array<i64: 1, 128>}, {transform_indices = @transform_1, window_bounds = array<i64: 4, 128>}, {transform_indices = @transform_2, window_bounds = array<i64: 4, 128>}]} {
    %c0 = arith.constant 0 : index
    %c0_0 = arith.constant 0 : index
    %0 = vector.load %arg3[%c0, %c0_0] : memref<4x128xf32, #tpu.memory_space<vmem>>, vector<4x128xf32>
    %c0_1 = arith.constant 0 : index
    %c0_2 = arith.constant 0 : index
    %1 = vector.load %arg2[%c0_1, %c0_2] : memref<1x128xf32, #tpu.memory_space<vmem>>, vector<1x128xf32>
    %2 = math.tanh %0 : vector<4x128xf32>
    %3 = vector.broadcast %1 : vector<1x128xf32> to vector<4x128xf32>
    %4 = arith.mulf %3, %2 : vector<4x128xf32>
    %c0_3 = arith.constant 0 : index
    %c0_4 = arith.constant 0 : index
    %5 = vector.load %arg4[%c0_3, %c0_4] : memref<4x128xf32, #tpu.memory_space<vmem>>, vector<4x128xf32>
    tpu.vector_store %arg4[%c0_3, %c0_4], %4 {strides = array<i32>} : memref<4x128xf32, #tpu.memory_space<vmem>>, vector<4x128xf32>,
    return
  }
  func.func @transform_0(%arg0: i32, %arg1: i32) -> (i32, i32) {
    %c0_i32 = arith.constant 0 : i32
    %c0_i32_0 = arith.constant 0 : i32
    return %c0_i32, %arg0 : i32, i32
  }
  func.func @transform_1(%arg0: i32, %arg1: i32) -> (i32, i32) {
    %c0_i32 = arith.constant 0 : i32
    return %arg1, %arg0 : i32, i32
  }
  func.func @transform_2(%arg0: i32, %arg1: i32) -> (i32, i32) {
    %c0_i32 = arith.constant 0 : i32
    return %arg1, %arg0 : i32, i32
  }
}

</mosaic_0001>

<llo_original>
// kernel: tpu_custom_call.1
$region0: #{tpu_custom_call.1}
  #allocation0 [shape = 'u32[]', space=smem, size = 0x4, offset = 0x4, fixed_abs, tag = 'smem constant byte address 0x4 - core index']
  #allocation1 [shape = 'u32[144,128]{1,0:T(1,128)}', space=vmem, size = 0x12000, scoped, tag = 'internal scratch']
  %s0 = inlined_call_operand.hbm [shape: f32[1,128], index: 0, kind: input, shape index: {}]
  %s1 = inlined_call_operand.hbm [shape: f32[4,128], index: 1, kind: input, shape index: {}]
  %s2 = inlined_call_operand.hbm [shape: f32[4,128], index: 2, kind: output, shape index: {}]
  %s3 = sld [smem:[#allocation0]]
  $region26: #{tpu_custom_call.1} parent=0
    _
  %s5 = ssub.s32 1, %s3
  %s6 = scalar_select 0, %s5, %s3
  $region1: #{tpu_custom_call.1} parent=0
    #allocation2 [shape = 'u8[512]{0}', space=vmem, size = 0x400, scoped, tag = 'input window, operand 0, single buffered']
    #allocation3 [shape = 's32[1]{0}', space=sflag, size = 0x4, scoped, tag = 'scoped memory for tpu_custom_call.1']
    #allocation4 [shape = 's32[1]{0}', space=sflag, size = 0x4, scoped, tag = 'scoped memory for tpu_custom_call.1']
    #allocation5 [shape = 'u8[2048]{0}', space=vmem, size = 0x800, scoped, tag = 'input window, operand 1, single buffered']
    #allocation6 [shape = 's32[1]{0}', space=sflag, size = 0x4, scoped, tag = 'scoped memory for tpu_custom_call.1']
    #allocation7 [shape = 'u8[2048]{0}', space=vmem, size = 0x800, scoped, tag = 'output window, operand 0, single buffered']
    %7 = vsyncpa [#allocation3], 0
    %8 = vsyncpa [#allocation6], 0
    %9 = vsyncpa [#allocation4], 0
    // Predicated region
    $region2: #{tpu_custom_call.1} parent=1 // pred_check
      _
    $region3: #{tpu_custom_call.1} parent=1 // pred_check_branch
      %11 = sbr.rel (0) target = $region5
    $region4: #{tpu_custom_call.1} parent=1 // pred_region
      %s13 = ssub.s32 16, 16
      %14 = vsyncadd [#allocation3], %s13
      %s16 = sshll.u32 [#allocation2], 4
      %s17 = int_to_ptr.vmem [resolvable:$true] %s16
      %19 = dma.hbm_to_vmem [thread:$0]  %s0, 16, %s17, [#allocation3]
    $region5: #{tpu_custom_call.1} parent=1 // pred_fallthru
      _
    // Predicated region
    $region6: #{tpu_custom_call.1} parent=1 // pred_check
      _
    $region7: #{tpu_custom_call.1} parent=1 // pred_check_branch
      %21 = sbr.rel (0) target = $region9
    $region8: #{tpu_custom_call.1} parent=1 // pred_region
      %s23 = ssub.s32 64, 64
      %24 = vsyncadd [#allocation6], %s23
      %s26 = sshll.u32 [#allocation5], 4
      %s27 = int_to_ptr.vmem [resolvable:$true] %s26
      %29 = dma.hbm_to_vmem [thread:$0]  %s1, 64, %s27, [#allocation6]
    $region9: #{tpu_custom_call.1} parent=1 // pred_fallthru
      _
    // Predicated region
    $region10: #{tpu_custom_call.1} parent=1 // pred_check
      _
    $region11: #{tpu_custom_call.1} parent=1 // pred_check_branch
      %31 = sbr.rel (0) target = $region13
    $region12: #{tpu_custom_call.1} parent=1 // pred_region
      %32 = dma.done [#allocation3], 16
    $region13: #{tpu_custom_call.1} parent=1 // pred_fallthru
      _
    // Predicated region
    $region14: #{tpu_custom_call.1} parent=1 // pred_check
      _
    $region15: #{tpu_custom_call.1} parent=1 // pred_check_branch
      %34 = sbr.rel (0) target = $region17
    $region16: #{tpu_custom_call.1} parent=1 // pred_region
      %35 = dma.done [#allocation6], 64
    $region17: #{tpu_custom_call.1} parent=1 // pred_fallthru
      _
    %v36 = vld [vmem:[#allocation5] sm:$0xf]
    %v37 = vld [vmem:[#allocation2] sm:$0x1]
    %v38 = vtanh.pop %v36
    %v40 = vlaneseq
    %v41 = vshrl.u32 %v40, 7
    %v42 = vsub.s32 0, %v41
    %v43 = vrot.slane %v37, %v42
    %v45 = vmul.f32 %v43, %v38
    %46 = vst [vmem:[#allocation7] sm:$0xf] %v45
    // Predicated region
    $region18: #{tpu_custom_call.1} parent=1 // pred_check
      _
    $region19: #{tpu_custom_call.1} parent=1 // pred_check_branch
      %48 = sbr.rel (0) target = $region21
    $region20: #{tpu_custom_call.1} parent=1 // pred_region
      %s50 = ssub.s32 64, 64
      %51 = vsyncadd [#allocation4], %s50
      %s53 = sshll.u32 [#allocation7], 4
      %s54 = int_to_ptr.vmem [resolvable:$true] %s53
      %56 = dma.vmem_to_hbm [thread:$0]  %s54, 64, %s2, [#allocation4]
    $region21: #{tpu_custom_call.1} parent=1 // pred_fallthru
      _
    // Predicated region
    $region22: #{tpu_custom_call.1} parent=1 // pred_check
      _
    $region23: #{tpu_custom_call.1} parent=1 // pred_check_branch
      %58 = sbr.rel (0) target = $region25
    $region24: #{tpu_custom_call.1} parent=1 // pred_region
      %59 = dma.done [#allocation4], 64
    $region25: #{tpu_custom_call.1} parent=1 // pred_fallthru
      _
    %60 = vsyncpa [#allocation3], 1
    %61 = vsyncpa [#allocation6], 1
    %62 = vsyncpa [#allocation4], 1

</llo_original>
